<compile_context>
chip_gen: v7x
topology: tpu7x:2x2x1
jax: 0.10.0
libtpu: 0.0.40
codegen_flags: <defaults>
</compile_context>

<pallas_src>
import functools

import jax
import jax.numpy as jnp
from jax import lax
from jax.experimental import pallas as pl
from jax.experimental.pallas import tpu as pltpu


def _round_up(x, m):
    return (x + m - 1) // m * m


def _scatter_kernel(tile_starts_ref, local_idx_ref, vf_ref, out_ref,
                    canvas_ref, *, n_tiles):
    """One grid step == one (batch element, canvas row-tile).

    tile_starts_ref : SMEM int32 [B*n_tiles + 1]  per-(batch,tile) pillar start
    local_idx_ref   : SMEM int32 [P]              canvas row within the tile
    vf_ref          : VMEM       [P, C_pad]       sorted, channel-padded pillars
    out_ref         : VMEM       [1, C, tile]     lane-dense NCHW output block
    canvas_ref      : VMEM       [tile_pad, C_pad] scratch canvas tile
    """
    b = pl.program_id(0)
    t = pl.program_id(1)
    lin = b * n_tiles + t
    start = tile_starts_ref[lin]
    stop = tile_starts_ref[lin + 1]

    # torch.zeros(...) equivalent for this canvas tile.
    canvas_ref[...] = jnp.zeros_like(canvas_ref)

    def body(p, carry):
        row = local_idx_ref[p]
        # 1-sublane, full-lane (unmasked) store into the VMEM scratch tile.
        canvas_ref[pl.ds(row, 1), :] = vf_ref[pl.ds(p, 1), :]
        return carry

    # Sequential loop preserves PyTorch's last-write-wins semantics for
    # duplicate coordinates (stable sort in the wrapper keeps original order).
    lax.fori_loop(start, stop, body, 0)

    # [tile_pad, C_pad] -> [C_pad, tile_pad] on the XLU, then slice to the
    # real (C, tile) and write the output block lane-dense (NCHW directly).
    c_out = out_ref.shape[1]
    tile_out = out_ref.shape[2]
    transposed = jnp.transpose(canvas_ref[...], (1, 0))
    out_ref[0, :, :] = transposed[:c_out, :tile_out].astype(out_ref.dtype)


class PointPillarsScatter:
    """JAX/Pallas port of second.pytorch.models.pointpillars.PointPillarsScatter."""

    _MAX_TILE = 2048  # canvas rows per tile (multiple of 128)

    def __init__(self, output_shape, num_input_features=64):
        self.name = "PointPillarsScatter"
        self.output_shape = output_shape
        self.ny = output_shape[2]
        self.nx = output_shape[3]
        self.nchannels = num_input_features
        # No learnable parameters (pure scatter).

    def __call__(self, voxel_features, coords, batch_size):
        P, C = voxel_features.shape
        assert C == self.nchannels
        ny, nx = self.ny, self.nx
        nxy = ny * nx
        dtype = voxel_features.dtype

        # ---- tiling choices -------------------------------------------------
        tile = nxy if nxy <= self._MAX_TILE else self._MAX_TILE
        n_tiles = pl.cdiv(nxy, tile)
        tile_pad = _round_up(tile, 128)     # aligned scratch / transpose shapes
        c_pad = _round_up(C, 128)

        # ---- wrapper-side preprocessing (cheap XLA ops, O(P)) ---------------
        coords = coords.astype(jnp.int32)
        batch_id = coords[:, 0]
        flat_idx = coords[:, 2] * nx + coords[:, 3]
        # TODO(synk): coords are assumed in-range (0<=y<ny, 0<=x<nx); Pallas
        # does not bounds-check VMEM stores for out-of-range / sentinel coords.

        # Pillars of batches outside [0, batch_size) are ignored, matching the
        # PyTorch per-batch mask.
        valid = (batch_id >= 0) & (batch_id < batch_size)
        key = jnp.where(valid, batch_id * nxy + flat_idx, batch_size * nxy)

        order = jnp.argsort(key)                      # stable -> keeps order
        key_sorted = key[order]
        vf_sorted = voxel_features[order]
        if c_pad > C:
            vf_sorted = jnp.pad(vf_sorted, ((0, 0), (0, c_pad - C)))
        local_idx = (flat_idx[order] % tile).astype(jnp.int32)

        # Per-(batch, tile) start offsets into the sorted pillar table.
        b_ids = jnp.arange(batch_size, dtype=jnp.int32)
        t_ids = jnp.arange(n_tiles, dtype=jnp.int32)
        bounds = (b_ids[:, None] * nxy + t_ids[None, :] * tile).reshape(-1)
        bounds = jnp.concatenate(
            [bounds, jnp.array([batch_size * nxy], dtype=jnp.int32)])
        tile_starts = jnp.searchsorted(key_sorted, bounds).astype(jnp.int32)

        # ---- pallas_call ----------------------------------------------------
        # TODO(synk): for very large P, slice vf per tile (BoundedSlice or
        # manual DMA) instead of keeping the whole sorted table in VMEM.
        kernel = functools.partial(_scatter_kernel, n_tiles=n_tiles)

        grid_spec = pltpu.PrefetchScalarGridSpec(
            num_scalar_prefetch=2,            # tile_starts, local_idx -> SMEM
            grid=(batch_size, n_tiles),
            in_specs=[
                pl.BlockSpec((P, c_pad), lambda b, t, ts, li: (0, 0)),
            ],
            out_specs=pl.BlockSpec((1, C, tile),
                                   lambda b, t, ts, li: (b, 0, t)),
            scratch_shapes=[pltpu.VMEM((tile_pad, c_pad), dtype)],
        )

        canvas = pl.pallas_call(
            kernel,
            out_shape=jax.ShapeDtypeStruct((batch_size, C, nxy), dtype),
            grid_spec=grid_spec,
            compiler_params=pltpu.CompilerParams(
                dimension_semantics=("parallel", "parallel"),
                vmem_limit_bytes=48 * 1024 * 1024,
            ),
        )(tile_starts, local_idx, vf_sorted)

        # Output is already NCHW-flat [B, C, ny*nx]; only a free reshape left.
        return canvas.reshape(batch_size, self.nchannels, ny, nx)


def _reference(voxel_features, coords, batch_size, nchannels, ny, nx):
    """Pure-JAX reference matching the PyTorch forward."""
    out = []
    vf = jnp.asarray(voxel_features)
    cd = jnp.asarray(coords)
    for b in range(batch_size):
        canvas = jnp.zeros((nchannels, nx * ny), dtype=vf.dtype)
        mask = cd[:, 0] == b
        idx = cd[:, 2] * nx + cd[:, 3]
        canvas = canvas.T.at[jnp.where(mask, idx, nx * ny)].set(
            jnp.where(mask[:, None], vf, 0.0), mode="drop").T
        out.append(canvas)
    return jnp.stack(out, 0).reshape(batch_size, nchannels, ny, nx)


if __name__ == "__main__":
    key = jax.random.PRNGKey(0)

    batch_size = 2
    num_features = 64
    ny, nx = 16, 16
    pillars_per_batch = 16
    P = batch_size * pillars_per_batch

    k_vf, k_idx0, k_idx1 = jax.random.split(key, 3)

    voxel_features = jax.random.normal(k_vf, (P, num_features), dtype=jnp.float32)

    # Unique spatial locations per batch element (matches real PointPillars
    # data, where each pillar occupies a distinct (y, x) cell).
    flat0 = jax.random.permutation(k_idx0, ny * nx)[:pillars_per_batch]
    flat1 = jax.random.permutation(k_idx1, ny * nx)[:pillars_per_batch]
    flat = jnp.concatenate([flat0, flat1]).astype(jnp.int32)
    batch_idx = jnp.concatenate([
        jnp.zeros((pillars_per_batch,), jnp.int32),
        jnp.ones((pillars_per_batch,), jnp.int32),
    ])
    coords = jnp.stack(
        [batch_idx,
         jnp.zeros((P,), jnp.int32),           # z
         flat // nx,                            # y
         flat % nx],                            # x
        axis=1)

    module = PointPillarsScatter(output_shape=[1, 1, ny, nx, num_features],
                                 num_input_features=num_features)

    out = module(voxel_features, coords, batch_size)
    out = jax.block_until_ready(out)

    ref = _reference(voxel_features, coords, batch_size, num_features, ny, nx)
    assert out.shape == (batch_size, num_features, ny, nx)
    assert jnp.allclose(out, ref), "Pallas scatter does not match reference"

    print("KERNEL_OK")
</pallas_src>

<mosaic_0001>
module attributes {stable_mosaic.version = 11 : i64} {
  func.func @_scatter_kernel(%arg0: i32, %arg1: i32, %arg2: memref<3xi32, #tpu.memory_space<smem>>, %arg3: memref<32xi32, #tpu.memory_space<smem>>, %arg4: memref<32x128xf32, #tpu.memory_space<vmem>>, %arg5: memref<1x64x256xf32, #tpu.memory_space<vmem>>, %arg6: memref<256x128xf32, #tpu.memory_space<vmem>>) attributes {dimension_semantics = [#tpu.dimension_semantics<parallel>, #tpu.dimension_semantics<parallel>], iteration_bounds = array<i64: 2, 1>, scalar_prefetch = 2 : i64, scratch_operands = 1 : i64, tpu.core_type = #tpu.core_type<tc>, window_params = [{pipeline_mode = #tpu.pipeline_mode<synchronous>, transform_indices = @transform_0, window_bounds = array<i64: 32, 128>}, {transform_indices = @transform_1, window_bounds = array<i64: 1, 64, 256>}]} {
    %c1_i32 = arith.constant 1 : i32
    %0 = arith.muli %arg0, %c1_i32 : i32
    %1 = arith.addi %0, %arg1 : i32
    %2 = arith.index_cast %1 : i32 to index
    %3 = memref.load %arg2[%2] : memref<3xi32, #tpu.memory_space<smem>>
    %c1_i32_0 = arith.constant 1 : i32
    %4 = arith.addi %1, %c1_i32_0 : i32
    %5 = arith.index_cast %4 : i32 to index
    %6 = memref.load %arg2[%5] : memref<3xi32, #tpu.memory_space<smem>>
    %cst = arith.constant 0.000000e+00 : f32
    %7 = vector.broadcast %cst : f32 to vector<256x128xf32>
    %c0 = arith.constant 0 : index
    %c0_1 = arith.constant 0 : index
    %8 = vector.load %arg6[%c0, %c0_1] : memref<256x128xf32, #tpu.memory_space<vmem>>, vector<256x128xf32>
    tpu.vector_store %arg6[%c0, %c0_1], %7 {strides = array<i32>} : memref<256x128xf32, #tpu.memory_space<vmem>>, vector<256x128xf32>,
    %c0_i32 = arith.constant 0 : i32
    %9 = arith.subi %6, %3 : i32
    %10 = arith.addi %3, %9 : i32
    %c1_i32_2 = arith.constant 1 : i32
    scf.for %arg7 = %3 to %10 step %c1_i32_2  : i32 {
      %17 = arith.index_cast %arg7 : i32 to index
      %18 = memref.load %arg3[%17] : memref<32xi32, #tpu.memory_space<smem>>
      %19 = arith.index_cast %arg7 : i32 to index
      %c0_8 = arith.constant 0 : index
      %20 = vector.load %arg4[%19, %c0_8] : memref<32x128xf32, #tpu.memory_space<vmem>>, vector<1x128xf32>
      %21 = arith.index_cast %18 : i32 to index
      %c0_9 = arith.constant 0 : index
      %22 = vector.load %arg6[%21, %c0_9] : memref<256x128xf32, #tpu.memory_space<vmem>>, vector<1x128xf32>
      tpu.vector_store %arg6[%21, %c0_9], %20 {strides = array<i32>} : memref<256x128xf32, #tpu.memory_space<vmem>>, vector<1x128xf32>,
    }
    %c0_3 = arith.constant 0 : index
    %c0_4 = arith.constant 0 : index
    %11 = vector.load %arg6[%c0_3, %c0_4] : memref<256x128xf32, #tpu.memory_space<vmem>>, vector<256x128xf32>
    %12 = tpu.transpose %11, [1, 0] : vector<256x128xf32> -> vector<128x256xf32>
    %13 = vector.extract_strided_slice %12 {offsets = [0, 0], sizes = [64, 256], strides = [1, 1]} : vector<128x256xf32> to vector<64x256xf32>
    %c0_5 = arith.constant 0 : index
    %c0_6 = arith.constant 0 : index
    %c0_7 = arith.constant 0 : index
    %14 = vector.load %arg5[%c0_5, %c0_6, %c0_7] : memref<1x64x256xf32, #tpu.memory_space<vmem>>, vector<1x64x256xf32>
    %15 = vector.shape_cast %14 : vector<1x64x256xf32> to vector<64x256xf32>
    %16 = vector.shape_cast %13 : vector<64x256xf32> to vector<1x64x256xf32>
    tpu.vector_store %arg5[%c0_5, %c0_6, %c0_7], %16 {strides = array<i32>} : memref<1x64x256xf32, #tpu.memory_space<vmem>>, vector<1x64x256xf32>,
    return
  }
  func.func @transform_0(%arg0: i32, %arg1: i32, %arg2: memref<3xi32, #tpu.memory_space<smem>>, %arg3: memref<32xi32, #tpu.memory_space<smem>>) -> (i32, i32) {
    %c0_i32 = arith.constant 0 : i32
    %c0_i32_0 = arith.constant 0 : i32
    %c0_i32_1 = arith.constant 0 : i32
    return %c0_i32, %c0_i32_0 : i32, i32
  }
  func.func @transform_1(%arg0: i32, %arg1: i32, %arg2: memref<3xi32, #tpu.memory_space<smem>>, %arg3: memref<32xi32, #tpu.memory_space<smem>>) -> (i32, i32, i32) {
    %c0_i32 = arith.constant 0 : i32
    %c0_i32_0 = arith.constant 0 : i32
    return %arg0, %c0_i32, %arg1 : i32, i32, i32
  }
}

</mosaic_0001>

<llo_original>
// kernel: tpu_custom_call.1
$region0: #{tpu_custom_call.1}
  #allocation0 [shape = 'u32[]', space=smem, size = 0x4, offset = 0x4, fixed_abs, tag = 'smem constant byte address 0x4 - core index']
  #allocation1 [shape = 'u32[144,128]{1,0:T(1,128)}', space=vmem, size = 0x12000, scoped, tag = 'internal scratch']
  #allocation2 [shape = 'f32[256,128]{1,0:T(8,128)}', space=vmem, size = 0x20000, scoped, tag = 'scratch operand']
  #allocation3 [shape = 's32[1]{0}', space=sflag, size = 0x4, scoped, tag = 'scoped memory for tpu_custom_call.1']
  #allocation4 [shape = 'u8[512]{0}', space=smem, size = 0x200, scoped, tag = 'prefetched SMEM operand 0']
  #allocation5 [shape = 'u8[512]{0}', space=smem, size = 0x200, scoped, tag = 'prefetched SMEM operand 1']
  %s0 = inlined_call_operand.hbm [shape: s32[3], index: 0, kind: input, shape index: {}]
  %s1 = inlined_call_operand.vmem [shape: s32[32], index: 1, kind: input, shape index: {}]
  %s2 = inlined_call_operand.hbm [shape: f32[32,128], index: 2, kind: input, shape index: {}]
  %s3 = inlined_call_operand.hbm [shape: f32[2,64,256], index: 3, kind: output, shape index: {}]
  %s4 = sld [smem:[#allocation0]]
  $region48: #{tpu_custom_call.1} parent=0
    _
  %s6 = ssub.s32 1, %s4
  %s7 = scalar_select 0, %s6, %s4
  %9 = dma.hbm_to_smem %s0, 16, [#allocation4], [#allocation3]
  %s10 = sshll.u32 %s1, 4
  %s11 = int_to_ptr.vmem [resolvable:$true] %s10
  %13 = dma.vmem_to_smem %s11, 16, [#allocation5], [#allocation3]
  %14 = dma.done [#allocation3], 32
  %15 = sfence
  $region1: #{tpu_custom_call.1} parent=0
    #allocation6 [shape = 'u8[16384]{0}', space=vmem, size = 0x4000, scoped, tag = 'input window, operand 2, single buffered']
    #allocation7 [shape = 's32[2]{0}', space=sflag, size = 0x8, scoped, tag = 'scoped memory for tpu_custom_call.1']
    #allocation8 [shape = 's32[2]{0}', space=sflag, size = 0x8, scoped, tag = 'scoped memory for tpu_custom_call.1']
    #allocation9 [shape = 'u8[131072]{0}', space=vmem, size = 0x20000, scoped, tag = 'output window, operand 0']
    %16 = vsyncpa [#allocation7], 0
    %17 = vsyncpa [#allocation8], 0
    %s18 = scalar_lea.sflag [#allocation8], 1
    %19 = vsyncpa %s18, 0
    loop: start=0, step=1, limit=4
    $region2: #{tpu_custom_call.1} parent=1 // loop_pre_header
      _
    $region3: #{tpu_custom_call.1} parent=1 // loop_header
      %s21 = sphi 0, %s25
      %p22 = scmp.ge.s32.totalorder %s21, 4
      %s28 = sphi 0, %s40
      %s29 = sphi 0, %s36
      %s30 = sphi 0, %s28
      %s31 = sphi 0, %s29
      %s32 = sphi 0, %s30
      %s33 = sphi 0, %s31
      %s41 = sphi 0, %s41
      %s43 = sphi 0, %s41
      %s44 = sphi 0, %s43
      %s58 = sphi 0, %s44
      %s66 = sphi 0, %s68
      %s69 = sphi 0, %s66
      %s70 = sphi 0, %s69
      %s86 = sphi 0, %s70
    $region4: #{tpu_custom_call.1} parent=1 // loop_header_branch
      %24 = sbr.rel (%p22) target = $region8
    $region5: #{tpu_custom_call.1} parent=1 // loop_body
      %s26 = ssub.s32 %s21, 1
      %s27 = ssub.s32 %s21, 2
      %s34 = sadd.s32 1, %s29
      %p35 = scmp.ge.s32.totalorder %s34, 1
      %s36 = scalar_select %p35, 0, %s34
      %s37 = sadd.s32 1, %s28
      %s38 = scalar_select %p35, %s37, %s28
      %p39 = scmp.ge.s32.totalorder %s38, 2
      %s40 = scalar_select %p39, 0, %s38
      %s42 = sadd.s32 %s41, 1
      %p45 = scmp.eq.s32.totalorder %s21, 1
      %p46 = scmp.ne.s32.totalorder %s41, %s43
      %p47 = scmp.eq.s32.totalorder %s21, 0
      %p48 = por %p46, %p47
      %p49 = scmp.ne.s32.totalorder %s41, %s43
      %p50 = scmp.eq.s32.totalorder %s26, 1
      %p51 = por %p49, %p50
      %p52 = scmp.ne.s32.totalorder %s43, %s44
      %p53 = scmp.eq.s32.totalorder %s26, 0
      %p54 = por %p52, %p53
      %p55 = scmp.ne.s32.totalorder %s43, %s44
      %p56 = scmp.eq.s32.totalorder %s27, 1
      %p57 = por %p55, %p56
      %p59 = scmp.ne.s32.totalorder %s44, %s58
      %p60 = scmp.eq.s32.totalorder %s27, 0
      %p61 = por %p59, %p60
      %s62 = ssub.s32 %s28, %s40
      %s63 = ssub.s32 %s29, %s36
      %s64 = sor.u32 %s62, %s63
      %p65 = scmp.eq.s32.totalorder %s64, 0
      %s67 = sadd.s32 %s66, 1
      %s68 = scalar_select %p65, %s66, %s67
      %p71 = pneg %p65
      %p72 = scmp.eq.s32.totalorder %s21, 1
      %p73 = por %p71, %p72
      %p74 = scmp.ne.s32.totalorder %s66, %s69
      %p75 = scmp.eq.s32.totalorder %s21, 0
      %p76 = por %p74, %p75
      %p77 = scmp.ne.s32.totalorder %s66, %s69
      %p78 = scmp.eq.s32.totalorder %s26, 1
      %p79 = por %p77, %p78
      %p80 = scmp.ne.s32.totalorder %s69, %s70
      %p81 = scmp.eq.s32.totalorder %s26, 0
      %p82 = por %p80, %p81
      %p83 = scmp.ne.s32.totalorder %s69, %s70
      %p84 = scmp.eq.s32.totalorder %s27, 1
      %p85 = por %p83, %p84
      %p87 = scmp.ne.s32.totalorder %s70, %s86
      %p88 = scmp.eq.s32.totalorder %s27, 0
      %p89 = por %p87, %p88
      %p90 = scmp.le.s32.totalorder 1, %s21
      %p91 = scmp.lt.s32.totalorder %s21, 3
      %p92 = pnand %p90, %p91
      %p93 = pneg %p92
      // Predicated region
      $region9: #{tpu_custom_call.1} parent=5 // pred_check
        _
      $region10: #{tpu_custom_call.1} parent=5 // pred_check_branch
        %95 = sbr.rel (%p92) target = $region12
      $region11: #{tpu_custom_call.1} parent=5 // pred_region
        %s96 = ssub.s32 %s21, 1
        // Predicated region
        $region13: #{tpu_custom_call.1} parent=11 // pred_check
          %p97 = pneg %p54
        $region14: #{tpu_custom_call.1} parent=11 // pred_check_branch
          %99 = sbr.rel (%p97) target = $region16
        $region15: #{tpu_custom_call.1} parent=11 // pred_region
          %s101 = ssub.s32 512, 512
          %102 = vsyncadd [#allocation7], %s101
          %s103 = sshll.u32 [#allocation6], 4
          %s104 = int_to_ptr.vmem [resolvable:$true] %s103
          %109 = dma.hbm_to_vmem [thread:$0]  %s2, 512, %s104, [#allocation7], 128, 128, 8
        $region16: #{tpu_custom_call.1} parent=11 // pred_fallthru
          _
      $region12: #{tpu_custom_call.1} parent=5 // pred_fallthru
        _
      %p110 = scmp.lt.s32.totalorder %s21, 2
      // Predicated region
      $region17: #{tpu_custom_call.1} parent=5 // pred_check
        %p111 = pneg %p110
      $region18: #{tpu_custom_call.1} parent=5 // pred_check_branch
        %113 = sbr.rel (%p111) target = $region20
      $region19: #{tpu_custom_call.1} parent=5 // pred_region
        _
      $region20: #{tpu_custom_call.1} parent=5 // pred_fallthru
        _
      %p114 = scmp.le.s32.totalorder 1, %s21
      %p115 = scmp.lt.s32.totalorder %s21, 3
      %p116 = pnand %p114, %p115
      %p117 = pneg %p116
      // Predicated region
      $region21: #{tpu_custom_call.1} parent=5 // pred_check
        _
      $region22: #{tpu_custom_call.1} parent=5 // pred_check_branch
        %119 = sbr.rel (%p116) target = $region24
      $region23: #{tpu_custom_call.1} parent=5 // pred_region
        %s120 = ssub.s32 %s21, 1
        // Predicated region
        $region25: #{tpu_custom_call.1} parent=23 // pred_check
          %p121 = pneg %p54
        $region26: #{tpu_custom_call.1} parent=23 // pred_check_branch
          %123 = sbr.rel (%p121) target = $region28
        $region27: #{tpu_custom_call.1} parent=23 // pred_region
          %124 = dma.done [#allocation7], 512
        $region28: #{tpu_custom_call.1} parent=23 // pred_fallthru
          _
        %p125 = pneg %p54
        %p126 = pneg %p51
        %p127 = pneg %p82
        %p128 = pneg %p79
        %s129 = sand.u32 %s69, 1
        %s130 = scalar_lea.sflag [#allocation8], %s129
        %s131 = sand.u32 %s69, 1
        %s132 = smul.addr %s131, 128
        %s133 = scalar_lea.vmem [#allocation9], %s132
        %s134 = smul.u32 2, %s31
        %s135 = sadd.s32 %s30, %s31
        %s136 = sld [smem:[#allocation4 + %s135]]
        %s137 = sadd.s32 %s135, 1
        %s138 = sld [smem:[#allocation4 + %s137]]
        %139 = vst [vmem:[#allocation2] sm:$0xff] 0.0
        %140 = vst [vmem:[#allocation2 + $0x8] sm:$0xff] 0.0
        %141 = vst [vmem:[#allocation2 + $0x10] sm:$0xff] 0.0
        %142 = vst [vmem:[#allocation2 + $0x18] sm:$0xff] 0.0
        %143 = vst [vmem:[#allocation2 + $0x20] sm:$0xff] 0.0
        %144 = vst [vmem:[#allocation2 + $0x28] sm:$0xff] 0.0
        %145 = vst [vmem:[#allocation2 + $0x30] sm:$0xff] 0.0
        %146 = vst [vmem:[#allocation2 + $0x38] sm:$0xff] 0.0
        %147 = vst [vmem:[#allocation2 + $0x40] sm:$0xff] 0.0
        %148 = vst [vmem:[#allocation2 + $0x48] sm:$0xff] 0.0
        %149 = vst [vmem:[#allocation2 + $0x50] sm:$0xff] 0.0
        %150 = vst [vmem:[#allocation2 + $0x58] sm:$0xff] 0.0
        %151 = vst [vmem:[#allocation2 + $0x60] sm:$0xff] 0.0
        %152 = vst [vmem:[#allocation2 + $0x68] sm:$0xff] 0.0
        %153 = vst [vmem:[#allocation2 + $0x70] sm:$0xff] 0.0
        %154 = vst [vmem:[#allocation2 + $0x78] sm:$0xff] 0.0
        %155 = vst [vmem:[#allocation2 + $0x80] sm:$0xff] 0.0
        %156 = vst [vmem:[#allocation2 + $0x88] sm:$0xff] 0.0
        %157 = vst [vmem:[#allocation2 + $0x90] sm:$0xff] 0.0
        %158 = vst [vmem:[#allocation2 + $0x98] sm:$0xff] 0.0
        %159 = vst [vmem:[#allocation2 + $0xa0] sm:$0xff] 0.0
        %160 = vst [vmem:[#allocation2 + $0xa8] sm:$0xff] 0.0
        %161 = vst [vmem:[#allocation2 + $0xb0] sm:$0xff] 0.0
        %162 = vst [vmem:[#allocation2 + $0xb8] sm:$0xff] 0.0
        %163 = vst [vmem:[#allocation2 + $0xc0] sm:$0xff] 0.0
        %164 = vst [vmem:[#allocation2 + $0xc8] sm:$0xff] 0.0
        %165 = vst [vmem:[#allocation2 + $0xd0] sm:$0xff] 0.0
        %166 = vst [vmem:[#allocation2 + $0xd8] sm:$0xff] 0.0
        %167 = vst [vmem:[#allocation2 + $0xe0] sm:$0xff] 0.0
        %168 = vst [vmem:[#allocation2 + $0xe8] sm:$0xff] 0.0
        %169 = vst [vmem:[#allocation2 + $0xf0] sm:$0xff] 0.0
        %170 = vst [vmem:[#allocation2 + $0xf8] sm:$0xff] 0.0
        // While loop
        $region29: #{tpu_custom_call.1} parent=23 // loop_pre_header
          _
        $region30: #{tpu_custom_call.1} parent=23 // loop_header
          %s172 = sphi %s136, %s174
          %p173 = scmp.ge.s32.totalorder %s172, %s138
        $region31: #{tpu_custom_call.1} parent=23 // loop_header_branch
          %176 = sbr.rel (%p173) target = $region35
        $region32: #{tpu_custom_call.1} parent=23 // loop_body
          %s177 = sld [smem:[#allocation5 + %s172]]
          %s178 = scalar_lea.vmem [#allocation6], %s172
          %v179 = vld [vmem:[%s178] sm:$0x1]
          %s180 = scalar_lea.vmem [#allocation2], %s177
          %181 = vst [vmem:[%s180] sm:$0x1] %v179
        $region33: #{tpu_custom_call.1} parent=23 // loop_footer
          %s174 = sadd.s32 %s172, 1
        $region34: #{tpu_custom_call.1} parent=23 // loop_footer_branch
          %171 = sbr.rel target = $region30
        $region35: #{tpu_custom_call.1} parent=23 // loop_exit
          _
        %v182 = vld [vmem:[#allocation2] sm:$0xff]
        %v183 = vld [vmem:[#allocation2 + $0x8] sm:$0xff]
        %v184 = vld [vmem:[#allocation2 + $0x10] sm:$0xff]
        %v185 = vld [vmem:[#allocation2 + $0x18] sm:$0xff]
        %v186 = vld [vmem:[#allocation2 + $0x20] sm:$0xff]
        %v187 = vld [vmem:[#allocation2 + $0x28] sm:$0xff]
        %v188 = vld [vmem:[#allocation2 + $0x30] sm:$0xff]
        %v189 = vld [vmem:[#allocation2 + $0x38] sm:$0xff]
        %v190 = vld [vmem:[#allocation2 + $0x40] sm:$0xff]
        %v191 = vld [vmem:[#allocation2 + $0x48] sm:$0xff]
        %v192 = vld [vmem:[#allocation2 + $0x50] sm:$0xff]
        %v193 = vld [vmem:[#allocation2 + $0x58] sm:$0xff]
        %v194 = vld [vmem:[#allocation2 + $0x60] sm:$0xff]
        %v195 = vld [vmem:[#allocation2 + $0x68] sm:$0xff]
        %v196 = vld [vmem:[#allocation2 + $0x70] sm:$0xff]
        %v197 = vld [vmem:[#allocation2 + $0x78] sm:$0xff]
        %v198 = vld [vmem:[#allocation2 + $0x80] sm:$0xff]
        %v199 = vld [vmem:[#allocation2 + $0x88] sm:$0xff]
        %v200 = vld [vmem:[#allocation2 + $0x90] sm:$0xff]
        %v201 = vld [vmem:[#allocation2 + $0x98] sm:$0xff]
        %v202 = vld [vmem:[#allocation2 + $0xa0] sm:$0xff]
        %v203 = vld [vmem:[#allocation2 + $0xa8] sm:$0xff]
        %v204 = vld [vmem:[#allocation2 + $0xb0] sm:$0xff]
        %v205 = vld [vmem:[#allocation2 + $0xb8] sm:$0xff]
        %v206 = vld [vmem:[#allocation2 + $0xc0] sm:$0xff]
        %v207 = vld [vmem:[#allocation2 + $0xc8] sm:$0xff]
        %v208 = vld [vmem:[#allocation2 + $0xd0] sm:$0xff]
        %v209 = vld [vmem:[#allocation2 + $0xd8] sm:$0xff]
        %v210 = vld [vmem:[#allocation2 + $0xe0] sm:$0xff]
        %v211 = vld [vmem:[#allocation2 + $0xe8] sm:$0xff]
        %v212 = vld [vmem:[#allocation2 + $0xf0] sm:$0xff]
        %v213 = vld [vmem:[#allocation2 + $0xf8] sm:$0xff]
        %214 = vxpose.xlu0.b32.start [1/16] %v182, 128
        %215 = vxpose.xlu0.b32.cont [2/16] %v183, 128
        %216 = vxpose.xlu0.b32.cont [3/16] %v184, 128
        %217 = vxpose.xlu0.b32.cont [4/16] %v185, 128
        %218 = vxpose.xlu0.b32.cont [5/16] %v186, 128
        %219 = vxpose.xlu0.b32.cont [6/16] %v187, 128
        %220 = vxpose.xlu0.b32.cont [7/16] %v188, 128
        %221 = vxpose.xlu0.b32.cont [8/16] %v189, 128
        %222 = vxpose.xlu0.b32.cont [9/16] %v190, 128
        %223 = vxpose.xlu0.b32.cont [10/16] %v191, 128
        %224 = vxpose.xlu0.b32.cont [11/16] %v192, 128
        %225 = vxpose.xlu0.b32.cont [12/16] %v193, 128
        %226 = vxpose.xlu0.b32.cont [13/16] %v194, 128
        %227 = vxpose.xlu0.b32.cont [14/16] %v195, 128
        %228 = vxpose.xlu0.b32.cont [15/16] %v196, 128
        %229 = vxpose.xlu0.b32.end [16/16] %v197, 128
        %v230 = vpop.trf.xlu0
        %v231 = vpop.trf.xlu0
        %v232 = vpop.trf.xlu0
        %v233 = vpop.trf.xlu0
        %v234 = vpop.trf.xlu0
        %v235 = vpop.trf.xlu0
        %v236 = vpop.trf.xlu0
        %v237 = vpop.trf.xlu0
        %v238 = vpop.trf.xlu0
        %v239 = vpop.trf.xlu0
        %v240 = vpop.trf.xlu0
        %v241 = vpop.trf.xlu0
        %v242 = vpop.trf.xlu0
        %v243 = vpop.trf.xlu0
        %v244 = vpop.trf.xlu0
        %v245 = vpop.trf.xlu0
        %246 = vxpose.xlu0.b32.start [1/16] %v198, 128
        %247 = vxpose.xlu0.b32.cont [2/16] %v199, 128
        %248 = vxpose.xlu0.b32.cont [3/16] %v200, 128
        %249 = vxpose.xlu0.b32.cont [4/16] %v201, 128
        %250 = vxpose.xlu0.b32.cont [5/16] %v202, 128
        %251 = vxpose.xlu0.b32.cont [6/16] %v203, 128
        %252 = vxpose.xlu0.b32.cont [7/16] %v204, 128
        %253 = vxpose.xlu0.b32.cont [8/16] %v205, 128
        %254 = vxpose.xlu0.b32.cont [9/16] %v206, 128
        %255 = vxpose.xlu0.b32.cont [10/16] %v207, 128
        %256 = vxpose.xlu0.b32.cont [11/16] %v208, 128
        %257 = vxpose.xlu0.b32.cont [12/16] %v209, 128
        %258 = vxpose.xlu0.b32.cont [13/16] %v210, 128
        %259 = vxpose.xlu0.b32.cont [14/16] %v211, 128
        %260 = vxpose.xlu0.b32.cont [15/16] %v212, 128
        %261 = vxpose.xlu0.b32.end [16/16] %v213, 128
        %v262 = vpop.trf.xlu0
        %v263 = vpop.trf.xlu0
        %v264 = vpop.trf.xlu0
        %v265 = vpop.trf.xlu0
        %v266 = vpop.trf.xlu0
        %v267 = vpop.trf.xlu0
        %v268 = vpop.trf.xlu0
        %v269 = vpop.trf.xlu0
        %v270 = vpop.trf.xlu0
        %v271 = vpop.trf.xlu0
        %v272 = vpop.trf.xlu0
        %v273 = vpop.trf.xlu0
        %v274 = vpop.trf.xlu0
        %v275 = vpop.trf.xlu0
        %v276 = vpop.trf.xlu0
        %v277 = vpop.trf.xlu0
        %278 = vst [vmem:[%s133] sm:$0xff] %v230
        %279 = vst [vmem:[%s133 + $0x8] sm:$0xff] %v262
        %280 = vst [vmem:[%s133 + $0x10] sm:$0xff] %v231
        %281 = vst [vmem:[%s133 + $0x18] sm:$0xff] %v263
        %282 = vst [vmem:[%s133 + $0x20] sm:$0xff] %v232
        %283 = vst [vmem:[%s133 + $0x28] sm:$0xff] %v264
        %284 = vst [vmem:[%s133 + $0x30] sm:$0xff] %v233
        %285 = vst [vmem:[%s133 + $0x38] sm:$0xff] %v265
        %286 = vst [vmem:[%s133 + $0x40] sm:$0xff] %v234
        %287 = vst [vmem:[%s133 + $0x48] sm:$0xff] %v266
        %288 = vst [vmem:[%s133 + $0x50] sm:$0xff] %v235
        %289 = vst [vmem:[%s133 + $0x58] sm:$0xff] %v267
        %290 = vst [vmem:[%s133 + $0x60] sm:$0xff] %v236
        %291 = vst [vmem:[%s133 + $0x68] sm:$0xff] %v268
        %292 = vst [vmem:[%s133 + $0x70] sm:$0xff] %v237
        %293 = vst [vmem:[%s133 + $0x78] sm:$0xff] %v269
        %s294 = sand.u32 %s69, 1
        %s295 = scalar_lea.sflag [#allocation8], %s294
        %s296 = sand.u32 %s69, 1
        %s297 = smul.addr %s296, 128
        %s298 = scalar_lea.vmem [#allocation9], %s297
        // Predicated region
        $region36: #{tpu_custom_call.1} parent=23 // pred_check
          %p299 = pneg %p79
        $region37: #{tpu_custom_call.1} parent=23 // pred_check_branch
          %301 = sbr.rel (%p299) target = $region39
        $region38: #{tpu_custom_call.1} parent=23 // pred_region
          %s302 = smul.u32 2, %s31
          %s304 = ssub.s32 2048, 2048
          %305 = vsyncadd %s295, %s304
          %s306 = smul.addr %s30, 16
          %s307 = sadd.s32 %s302, %s306
          %s308 = smul.addr %s307, 128
          %s309 = scalar_lea.hbm %s3, %s308
          %s310 = sshll.u32 %s298, 4
          %s311 = int_to_ptr.vmem [resolvable:$true] %s310
          %316 = dma.vmem_to_hbm [thread:$0]  %s311, 2048, %s309, %s295, 256, 256, 16
        $region39: #{tpu_custom_call.1} parent=23 // pred_fallthru
          _
      $region24: #{tpu_custom_call.1} parent=5 // pred_fallthru
        _
      %p317 = scmp.le.s32.totalorder 2, %s21
      // Predicated region
      $region40: #{tpu_custom_call.1} parent=5 // pred_check
        %p318 = pneg %p317
      $region41: #{tpu_custom_call.1} parent=5 // pred_check_branch
        %320 = sbr.rel (%p318) target = $region43
      $region42: #{tpu_custom_call.1} parent=5 // pred_region
        %s321 = ssub.s32 %s21, 2
        // Predicated region
        $region44: #{tpu_custom_call.1} parent=42 // pred_check
          %p322 = pneg %p85
        $region45: #{tpu_custom_call.1} parent=42 // pred_check_branch
          %324 = sbr.rel (%p322) target = $region47
        $region46: #{tpu_custom_call.1} parent=42 // pred_region
          %s325 = sand.u32 %s70, 1
          %s326 = scalar_lea.sflag [#allocation8], %s325
          %s327 = sand.u32 %s70, 1
          %s328 = smul.addr %s327, 128
          %s329 = scalar_lea.vmem [#allocation9], %s328
          %330 = dma.done %s326, 2048
        $region47: #{tpu_custom_call.1} parent=42 // pred_fallthru
          _
      $region43: #{tpu_custom_call.1} parent=5 // pred_fallthru
        _
    $region6: #{tpu_custom_call.1} parent=1 // loop_footer
      %s25 = sadd.s32 1, %s21
    $region7: #{tpu_custom_call.1} parent=1 // loop_footer_branch
      %20 = sbr.rel target = $region3
    $region8: #{tpu_custom_call.1} parent=1 // loop_exit
      _
    %331 = vsyncpa [#allocation7], 1
    %s332 = scalar_lea.sflag [#allocation7], 1
    %333 = vsyncpa %s332, 1
    %334 = vsyncpa [#allocation8], 1
    %s335 = scalar_lea.sflag [#allocation8], 1
    %336 = vsyncpa %s335, 1

</llo_original>
